<compile_context>
chip_gen: v5e
topology: v5e:2x2
jax: 0.10.0
libtpu: 0.0.40
codegen_flags: <defaults>
</compile_context>

<pallas_src>
import jax
import jax.numpy as jnp
from jax import lax
from jax.experimental import pallas as pl
from jax.experimental.pallas import tpu as pltpu


_LANE = 128            # vreg lane width
_MAX_BLOCK_ROWS = 512  # 512 rows x 128 lanes x 4 B = 256 KiB per f32 block
_CHUNK_ROWS = 32       # in-kernel row chunk: 32 x 128 f32 = 4 vregs per array


def _process_rows(x_ref, o_ref, w1_ref, b1_ref, w2_ref, b2, r0, chunk, n_hidden):
    """Process `chunk` rows of the block starting at row r0 (pure VPU work)."""
    xc = x_ref[pl.ds(r0, chunk), :]                      # (chunk, C) chunk of batch

    def hidden_unit(j, acc):
        # Per hidden unit: scalar weights from SMEM, elementwise VALU ops on
        # dense batch data.  No MXU dispatch, no sublane broadcast of x, no
        # cross-sublane reduce.
        h = jnp.maximum(w1_ref[j] * xc + b1_ref[j], 0.0)
        return acc + w2_ref[j] * h

    acc = lax.fori_loop(0, n_hidden, hidden_unit,
                        jnp.zeros(xc.shape, jnp.float32), unroll=True)
    o_ref[pl.ds(r0, chunk), :] = (acc + b2).astype(o_ref.dtype)


def _mlp_kernel(x_ref, w1_ref, b1_ref, w2_ref, b2_ref, o_ref):
    """Fused y = relu(w1*x + b1) . w2 + b2 for a 1-in / 1-out MLP.

    x_ref : (TR, C) VMEM   batch elements, dense on sublanes and lanes
    w1_ref: (H,)    SMEM   hidden-layer weights (n_feature == 1)
    b1_ref: (H,)    SMEM   hidden-layer biases
    w2_ref: (H,)    SMEM   output-layer weights (n_output == 1)
    b2_ref: (1,)    SMEM   scalar output bias
    o_ref : (TR, C) VMEM   outputs, same layout as x
    """
    n_hidden = w1_ref.shape[0]
    tr = x_ref.shape[0]
    # Wrapper guarantees tr == 1 (tiny batch) or tr % _CHUNK_ROWS == 0.
    chunk = _CHUNK_ROWS if tr % _CHUNK_ROWS == 0 else tr
    n_chunks = tr // chunk
    b2 = b2_ref[0]

    if n_chunks == 1:
        _process_rows(x_ref, o_ref, w1_ref, b1_ref, w2_ref, b2, 0, chunk, n_hidden)
    else:
        @pl.loop(0, n_chunks)
        def _(c):
            r0 = pl.multiple_of(c * chunk, chunk)
            _process_rows(x_ref, o_ref, w1_ref, b1_ref, w2_ref, b2,
                          r0, chunk, n_hidden)


def net_forward(x, w1, b1, w2, b2):
    """Fused MLP forward pass as a single Pallas TPU kernel.

    x : (B, 1)        w1: (n_hidden, 1)    b1: (n_hidden,) or (n_hidden, 1)
    w2: (n_hidden, 1) b2: (1,)
    returns (B, 1)  ==  relu(x @ w1.T + b1) @ w2 + b2
    """
    B, n_feature = x.shape
    n_hidden = w1.shape[0]
    n_output = w2.shape[1]
    assert n_feature == 1 and n_output == 1, "kernel specialized for 1-in/1-out"

    dtype = x.dtype
    x_flat = x.reshape(B)
    w1_s = w1.reshape(n_hidden)
    b1_s = b1.reshape(n_hidden)
    w2_s = w2.reshape(n_hidden)
    b2_s = b2.reshape(1)

    # --- choose a dense 2D batch layout ------------------------------------
    if B <= 8 * _LANE:
        # Tiny batch: one full-array (1, B) block; no padding, no tiling.
        rows, cols, block_rows = 1, B, 1
    else:
        # Dense (rows, 128) layout; blocks of up to 512 rows amortize the
        # per-grid-step overhead, and large batches get >= 2 blocks so the
        # "parallel" batch axis can use both v7x TensorCores.
        cols = _LANE
        rows_needed = pl.cdiv(B, _LANE)
        n_blocks = pl.cdiv(rows_needed, _MAX_BLOCK_ROWS)
        block_rows = pl.cdiv(pl.cdiv(rows_needed, n_blocks), _CHUNK_ROWS) * _CHUNK_ROWS
        rows = n_blocks * block_rows

    b_padded = rows * cols
    if b_padded != B:
        # Only the ragged tail is padded; when B already fits the layout
        # (e.g. any multiple of 4096) no host-side copy happens at all.
        x_flat = jnp.pad(x_flat, (0, b_padded - B))
    x2d = x_flat.reshape(rows, cols)

    grid = (rows // block_rows,)

    out2d = pl.pallas_call(
        _mlp_kernel,
        out_shape=jax.ShapeDtypeStruct((rows, cols), dtype),
        grid=grid,
        in_specs=[
            pl.BlockSpec((block_rows, cols), lambda i: (i, 0)),   # x, dense block
            pl.BlockSpec(memory_space=pltpu.MemorySpace.SMEM),    # w1 scalars
            pl.BlockSpec(memory_space=pltpu.MemorySpace.SMEM),    # b1 scalars
            pl.BlockSpec(memory_space=pltpu.MemorySpace.SMEM),    # w2 scalars
            pl.BlockSpec(memory_space=pltpu.MemorySpace.SMEM),    # b2 scalar
        ],
        out_specs=pl.BlockSpec((block_rows, cols), lambda i: (i, 0)),
        compiler_params=pltpu.CompilerParams(
            dimension_semantics=("parallel",),   # independent batch blocks
        ),
    )(x2d, w1_s, b1_s, w2_s, b2_s)

    out_flat = out2d.reshape(b_padded)
    if b_padded != B:
        out_flat = out_flat[:B]
    return out_flat.reshape(B, n_output)


def init_params(key, n_feature, n_hidden, n_output, dtype=jnp.float32):
    """PyTorch-style Linear init U(-1/sqrt(fan_in), 1/sqrt(fan_in))."""
    assert n_feature == 1 and n_output == 1
    k1, k2, k3, k4 = jax.random.split(key, 4)
    bound1 = 1.0 / jnp.sqrt(jnp.array(n_feature, dtype))
    bound2 = 1.0 / jnp.sqrt(jnp.array(n_hidden, dtype))
    w1 = jax.random.uniform(k1, (n_hidden, n_feature), dtype, -bound1, bound1)
    b1 = jax.random.uniform(k2, (n_hidden,), dtype, -bound1, bound1)
    w2 = jax.random.uniform(k3, (n_hidden, n_output), dtype, -bound2, bound2)
    b2 = jax.random.uniform(k4, (n_output,), dtype, -bound2, bound2)
    return w1, b1, w2, b2


def _reference(x, w1, b1, w2, b2):
    return jnp.maximum(x @ w1.T + b1, 0.0) @ w2 + b2


if __name__ == "__main__":
    # Shapes implied by the script: x reshaped to (N, 1) -> n_feature = 1.
    batch, n_feature, n_hidden, n_output = 8, 1, 32, 1

    key = jax.random.PRNGKey(0)
    kx, kp = jax.random.split(key)
    x = jax.random.normal(kx, (batch, n_feature), jnp.float32)
    w1, b1, w2, b2 = init_params(kp, n_feature, n_hidden, n_output)

    # Tiny batch: single (1, B) full-array block, grid = (1,).
    out = jax.block_until_ready(net_forward(x, w1, b1, w2, b2))
    ref = _reference(x, w1, b1, w2, b2)
    assert out.shape == (batch, n_output)
    assert jnp.allclose(out, ref, atol=1e-5, rtol=1e-5)

    # Medium batch: dense (rows, 128) layout, ragged tail padded, single block,
    # in-kernel 32-row chunk loop.
    x_mid = jax.random.normal(kx, (5000, n_feature), jnp.float32)
    out_mid = jax.block_until_ready(net_forward(x_mid, w1, b1, w2, b2))
    ref_mid = _reference(x_mid, w1, b1, w2, b2)
    assert out_mid.shape == (5000, n_output)
    assert jnp.allclose(out_mid, ref_mid, atol=1e-5, rtol=1e-5)

    # Large batch: no padding (multiple of 64K), 2 grid blocks -> both v7x TCs.
    x_big = jax.random.normal(kx, (131072, n_feature), jnp.float32)
    out_big = jax.block_until_ready(net_forward(x_big, w1, b1, w2, b2))
    ref_big = _reference(x_big, w1, b1, w2, b2)
    assert out_big.shape == (131072, n_output)
    assert jnp.allclose(out_big, ref_big, atol=1e-5, rtol=1e-5)

    print("KERNEL_OK")
</pallas_src>

<mosaic_0001>
module attributes {stable_mosaic.version = 11 : i64} {
  func.func @_mlp_kernel(%arg0: i32, %arg1: memref<1x8xf32, #tpu.memory_space<vmem>>, %arg2: memref<32xf32, #tpu.memory_space<smem>>, %arg3: memref<32xf32, #tpu.memory_space<smem>>, %arg4: memref<32xf32, #tpu.memory_space<smem>>, %arg5: memref<1xf32, #tpu.memory_space<smem>>, %arg6: memref<1x8xf32, #tpu.memory_space<vmem>>) attributes {dimension_semantics = [#tpu.dimension_semantics<parallel>], iteration_bounds = array<i64: 1>, scalar_prefetch = 0 : i64, scratch_operands = 0 : i64, tpu.core_type = #tpu.core_type<tc>, window_params = [{transform_indices = @transform_0, window_bounds = array<i64: 1, 8>}, {transform_indices = @transform_1, window_bounds = array<i64: 32>}, {transform_indices = @transform_2, window_bounds = array<i64: 32>}, {transform_indices = @transform_3, window_bounds = array<i64: 32>}, {transform_indices = @transform_4, window_bounds = array<i64: 1>}, {transform_indices = @transform_5, window_bounds = array<i64: 1, 8>}]} {
    %c0 = arith.constant 0 : index
    %0 = memref.load %arg5[%c0] : memref<1xf32, #tpu.memory_space<smem>>
    %c0_0 = arith.constant 0 : index
    %c0_1 = arith.constant 0 : index
    %1 = vector.load %arg1[%c0_0, %c0_1] : memref<1x8xf32, #tpu.memory_space<vmem>>, vector<1x8xf32>
    %cst = arith.constant 0.000000e+00 : f32
    %2 = vector.broadcast %cst : f32 to vector<1x8xf32>
    %c0_i32 = arith.constant 0 : i32
    %3 = arith.index_cast %c0_i32 : i32 to index
    %4 = memref.load %arg2[%3] : memref<32xf32, #tpu.memory_space<smem>>
    %5 = vector.broadcast %4 : f32 to vector<1x8xf32>
    %6 = arith.mulf %5, %1 : vector<1x8xf32>
    %7 = arith.index_cast %c0_i32 : i32 to index
    %8 = memref.load %arg3[%7] : memref<32xf32, #tpu.memory_space<smem>>
    %9 = vector.broadcast %8 : f32 to vector<1x8xf32>
    %10 = arith.addf %6, %9 : vector<1x8xf32>
    %cst_2 = arith.constant 0.000000e+00 : f32
    %11 = vector.broadcast %cst_2 : f32 to vector<1x8xf32>
    %12 = arith.maximumf %10, %11 : vector<1x8xf32>
    %13 = arith.index_cast %c0_i32 : i32 to index
    %14 = memref.load %arg4[%13] : memref<32xf32, #tpu.memory_space<smem>>
    %15 = vector.broadcast %14 : f32 to vector<1x8xf32>
    %16 = arith.mulf %15, %12 : vector<1x8xf32>
    %17 = arith.addf %2, %16 : vector<1x8xf32>
    %c1_i32 = arith.constant 1 : i32
    %18 = arith.index_cast %c1_i32 : i32 to index
    %19 = memref.load %arg2[%18] : memref<32xf32, #tpu.memory_space<smem>>
    %20 = vector.broadcast %19 : f32 to vector<1x8xf32>
    %21 = arith.mulf %20, %1 : vector<1x8xf32>
    %22 = arith.index_cast %c1_i32 : i32 to index
    %23 = memref.load %arg3[%22] : memref<32xf32, #tpu.memory_space<smem>>
    %24 = vector.broadcast %23 : f32 to vector<1x8xf32>
    %25 = arith.addf %21, %24 : vector<1x8xf32>
    %cst_3 = arith.constant 0.000000e+00 : f32
    %26 = vector.broadcast %cst_3 : f32 to vector<1x8xf32>
    %27 = arith.maximumf %25, %26 : vector<1x8xf32>
    %28 = arith.index_cast %c1_i32 : i32 to index
    %29 = memref.load %arg4[%28] : memref<32xf32, #tpu.memory_space<smem>>
    %30 = vector.broadcast %29 : f32 to vector<1x8xf32>
    %31 = arith.mulf %30, %27 : vector<1x8xf32>
    %32 = arith.addf %17, %31 : vector<1x8xf32>
    %c2_i32 = arith.constant 2 : i32
    %33 = arith.index_cast %c2_i32 : i32 to index
    %34 = memref.load %arg2[%33] : memref<32xf32, #tpu.memory_space<smem>>
    %35 = vector.broadcast %34 : f32 to vector<1x8xf32>
    %36 = arith.mulf %35, %1 : vector<1x8xf32>
    %37 = arith.index_cast %c2_i32 : i32 to index
    %38 = memref.load %arg3[%37] : memref<32xf32, #tpu.memory_space<smem>>
    %39 = vector.broadcast %38 : f32 to vector<1x8xf32>
    %40 = arith.addf %36, %39 : vector<1x8xf32>
    %cst_4 = arith.constant 0.000000e+00 : f32
    %41 = vector.broadcast %cst_4 : f32 to vector<1x8xf32>
    %42 = arith.maximumf %40, %41 : vector<1x8xf32>
    %43 = arith.index_cast %c2_i32 : i32 to index
    %44 = memref.load %arg4[%43] : memref<32xf32, #tpu.memory_space<smem>>
    %45 = vector.broadcast %44 : f32 to vector<1x8xf32>
    %46 = arith.mulf %45, %42 : vector<1x8xf32>
    %47 = arith.addf %32, %46 : vector<1x8xf32>
    %c3_i32 = arith.constant 3 : i32
    %48 = arith.index_cast %c3_i32 : i32 to index
    %49 = memref.load %arg2[%48] : memref<32xf32, #tpu.memory_space<smem>>
    %50 = vector.broadcast %49 : f32 to vector<1x8xf32>
    %51 = arith.mulf %50, %1 : vector<1x8xf32>
    %52 = arith.index_cast %c3_i32 : i32 to index
    %53 = memref.load %arg3[%52] : memref<32xf32, #tpu.memory_space<smem>>
    %54 = vector.broadcast %53 : f32 to vector<1x8xf32>
    %55 = arith.addf %51, %54 : vector<1x8xf32>
    %cst_5 = arith.constant 0.000000e+00 : f32
    %56 = vector.broadcast %cst_5 : f32 to vector<1x8xf32>
    %57 = arith.maximumf %55, %56 : vector<1x8xf32>
    %58 = arith.index_cast %c3_i32 : i32 to index
    %59 = memref.load %arg4[%58] : memref<32xf32, #tpu.memory_space<smem>>
    %60 = vector.broadcast %59 : f32 to vector<1x8xf32>
    %61 = arith.mulf %60, %57 : vector<1x8xf32>
    %62 = arith.addf %47, %61 : vector<1x8xf32>
    %c4_i32 = arith.constant 4 : i32
    %63 = arith.index_cast %c4_i32 : i32 to index
    %64 = memref.load %arg2[%63] : memref<32xf32, #tpu.memory_space<smem>>
    %65 = vector.broadcast %64 : f32 to vector<1x8xf32>
    %66 = arith.mulf %65, %1 : vector<1x8xf32>
    %67 = arith.index_cast %c4_i32 : i32 to index
    %68 = memref.load %arg3[%67] : memref<32xf32, #tpu.memory_space<smem>>
    %69 = vector.broadcast %68 : f32 to vector<1x8xf32>
    %70 = arith.addf %66, %69 : vector<1x8xf32>
    %cst_6 = arith.constant 0.000000e+00 : f32
    %71 = vector.broadcast %cst_6 : f32 to vector<1x8xf32>
    %72 = arith.maximumf %70, %71 : vector<1x8xf32>
    %73 = arith.index_cast %c4_i32 : i32 to index
    %74 = memref.load %arg4[%73] : memref<32xf32, #tpu.memory_space<smem>>
    %75 = vector.broadcast %74 : f32 to vector<1x8xf32>
    %76 = arith.mulf %75, %72 : vector<1x8xf32>
    %77 = arith.addf %62, %76 : vector<1x8xf32>
    %c5_i32 = arith.constant 5 : i32
    %78 = arith.index_cast %c5_i32 : i32 to index
    %79 = memref.load %arg2[%78] : memref<32xf32, #tpu.memory_space<smem>>
    %80 = vector.broadcast %79 : f32 to vector<1x8xf32>
    %81 = arith.mulf %80, %1 : vector<1x8xf32>
    %82 = arith.index_cast %c5_i32 : i32 to index
    %83 = memref.load %arg3[%82] : memref<32xf32, #tpu.memory_space<smem>>
    %84 = vector.broadcast %83 : f32 to vector<1x8xf32>
    %85 = arith.addf %81, %84 : vector<1x8xf32>
    %cst_7 = arith.constant 0.000000e+00 : f32
    %86 = vector.broadcast %cst_7 : f32 to vector<1x8xf32>
    %87 = arith.maximumf %85, %86 : vector<1x8xf32>
    %88 = arith.index_cast %c5_i32 : i32 to index
    %89 = memref.load %arg4[%88] : memref<32xf32, #tpu.memory_space<smem>>
    %90 = vector.broadcast %89 : f32 to vector<1x8xf32>
    %91 = arith.mulf %90, %87 : vector<1x8xf32>
    %92 = arith.addf %77, %91 : vector<1x8xf32>
    %c6_i32 = arith.constant 6 : i32
    %93 = arith.index_cast %c6_i32 : i32 to index
    %94 = memref.load %arg2[%93] : memref<32xf32, #tpu.memory_space<smem>>
    %95 = vector.broadcast %94 : f32 to vector<1x8xf32>
    %96 = arith.mulf %95, %1 : vector<1x8xf32>
    %97 = arith.index_cast %c6_i32 : i32 to index
    %98 = memref.load %arg3[%97] : memref<32xf32, #tpu.memory_space<smem>>
    %99 = vector.broadcast %98 : f32 to vector<1x8xf32>
    %100 = arith.addf %96, %99 : vector<1x8xf32>
    %cst_8 = arith.constant 0.000000e+00 : f32
    %101 = vector.broadcast %cst_8 : f32 to vector<1x8xf32>
    %102 = arith.maximumf %100, %101 : vector<1x8xf32>
    %103 = arith.index_cast %c6_i32 : i32 to index
    %104 = memref.load %arg4[%103] : memref<32xf32, #tpu.memory_space<smem>>
    %105 = vector.broadcast %104 : f32 to vector<1x8xf32>
    %106 = arith.mulf %105, %102 : vector<1x8xf32>
    %107 = arith.addf %92, %106 : vector<1x8xf32>
    %c7_i32 = arith.constant 7 : i32
    %108 = arith.index_cast %c7_i32 : i32 to index
    %109 = memref.load %arg2[%108] : memref<32xf32, #tpu.memory_space<smem>>
    %110 = vector.broadcast %109 : f32 to vector<1x8xf32>
    %111 = arith.mulf %110, %1 : vector<1x8xf32>
    %112 = arith.index_cast %c7_i32 : i32 to index
    %113 = memref.load %arg3[%112] : memref<32xf32, #tpu.memory_space<smem>>
    %114 = vector.broadcast %113 : f32 to vector<1x8xf32>
    %115 = arith.addf %111, %114 : vector<1x8xf32>
    %cst_9 = arith.constant 0.000000e+00 : f32
    %116 = vector.broadcast %cst_9 : f32 to vector<1x8xf32>
    %117 = arith.maximumf %115, %116 : vector<1x8xf32>
    %118 = arith.index_cast %c7_i32 : i32 to index
    %119 = memref.load %arg4[%118] : memref<32xf32, #tpu.memory_space<smem>>
    %120 = vector.broadcast %119 : f32 to vector<1x8xf32>
    %121 = arith.mulf %120, %117 : vector<1x8xf32>
    %122 = arith.addf %107, %121 : vector<1x8xf32>
    %c8_i32 = arith.constant 8 : i32
    %123 = arith.index_cast %c8_i32 : i32 to index
    %124 = memref.load %arg2[%123] : memref<32xf32, #tpu.memory_space<smem>>
    %125 = vector.broadcast %124 : f32 to vector<1x8xf32>
    %126 = arith.mulf %125, %1 : vector<1x8xf32>
    %127 = arith.index_cast %c8_i32 : i32 to index
    %128 = memref.load %arg3[%127] : memref<32xf32, #tpu.memory_space<smem>>
    %129 = vector.broadcast %128 : f32 to vector<1x8xf32>
    %130 = arith.addf %126, %129 : vector<1x8xf32>
    %cst_10 = arith.constant 0.000000e+00 : f32
    %131 = vector.broadcast %cst_10 : f32 to vector<1x8xf32>
    %132 = arith.maximumf %130, %131 : vector<1x8xf32>
    %133 = arith.index_cast %c8_i32 : i32 to index
    %134 = memref.load %arg4[%133] : memref<32xf32, #tpu.memory_space<smem>>
    %135 = vector.broadcast %134 : f32 to vector<1x8xf32>
    %136 = arith.mulf %135, %132 : vector<1x8xf32>
    %137 = arith.addf %122, %136 : vector<1x8xf32>
    %c9_i32 = arith.constant 9 : i32
    %138 = arith.index_cast %c9_i32 : i32 to index
    %139 = memref.load %arg2[%138] : memref<32xf32, #tpu.memory_space<smem>>
    %140 = vector.broadcast %139 : f32 to vector<1x8xf32>
    %141 = arith.mulf %140, %1 : vector<1x8xf32>
    %142 = arith.index_cast %c9_i32 : i32 to index
    %143 = memref.load %arg3[%142] : memref<32xf32, #tpu.memory_space<smem>>
    %144 = vector.broadcast %143 : f32 to vector<1x8xf32>
    %145 = arith.addf %141, %144 : vector<1x8xf32>
    %cst_11 = arith.constant 0.000000e+00 : f32
    %146 = vector.broadcast %cst_11 : f32 to vector<1x8xf32>
    %147 = arith.maximumf %145, %146 : vector<1x8xf32>
    %148 = arith.index_cast %c9_i32 : i32 to index
    %149 = memref.load %arg4[%148] : memref<32xf32, #tpu.memory_space<smem>>
    %150 = vector.broadcast %149 : f32 to vector<1x8xf32>
    %151 = arith.mulf %150, %147 : vector<1x8xf32>
    %152 = arith.addf %137, %151 : vector<1x8xf32>
    %c10_i32 = arith.constant 10 : i32
    %153 = arith.index_cast %c10_i32 : i32 to index
    %154 = memref.load %arg2[%153] : memref<32xf32, #tpu.memory_space<smem>>
    %155 = vector.broadcast %154 : f32 to vector<1x8xf32>
    %156 = arith.mulf %155, %1 : vector<1x8xf32>
    %157 = arith.index_cast %c10_i32 : i32 to index
    %158 = memref.load %arg3[%157] : memref<32xf32, #tpu.memory_space<smem>>
    %159 = vector.broadcast %158 : f32 to vector<1x8xf32>
    %160 = arith.addf %156, %159 : vector<1x8xf32>
    %cst_12 = arith.constant 0.000000e+00 : f32
    %161 = vector.broadcast %cst_12 : f32 to vector<1x8xf32>
    %162 = arith.maximumf %160, %161 : vector<1x8xf32>
    %163 = arith.index_cast %c10_i32 : i32 to index
    %164 = memref.load %arg4[%163] : memref<32xf32, #tpu.memory_space<smem>>
    %165 = vector.broadcast %164 : f32 to vector<1x8xf32>
    %166 = arith.mulf %165, %162 : vector<1x8xf32>
    %167 = arith.addf %152, %166 : vector<1x8xf32>
    %c11_i32 = arith.constant 11 : i32
    %168 = arith.index_cast %c11_i32 : i32 to index
    %169 = memref.load %arg2[%168] : memref<32xf32, #tpu.memory_space<smem>>
    %170 = vector.broadcast %169 : f32 to vector<1x8xf32>
    %171 = arith.mulf %170, %1 : vector<1x8xf32>
    %172 = arith.index_cast %c11_i32 : i32 to index
    %173 = memref.load %arg3[%172] : memref<32xf32, #tpu.memory_space<smem>>
    %174 = vector.broadcast %173 : f32 to vector<1x8xf32>
    %175 = arith.addf %171, %174 : vector<1x8xf32>
    %cst_13 = arith.constant 0.000000e+00 : f32
    %176 = vector.broadcast %cst_13 : f32 to vector<1x8xf32>
    %177 = arith.maximumf %175, %176 : vector<1x8xf32>
    %178 = arith.index_cast %c11_i32 : i32 to index
    %179 = memref.load %arg4[%178] : memref<32xf32, #tpu.memory_space<smem>>
    %180 = vector.broadcast %179 : f32 to vector<1x8xf32>
    %181 = arith.mulf %180, %177 : vector<1x8xf32>
    %182 = arith.addf %167, %181 : vector<1x8xf32>
    %c12_i32 = arith.constant 12 : i32
    %183 = arith.index_cast %c12_i32 : i32 to index
    %184 = memref.load %arg2[%183] : memref<32xf32, #tpu.memory_space<smem>>
    %185 = vector.broadcast %184 : f32 to vector<1x8xf32>
    %186 = arith.mulf %185, %1 : vector<1x8xf32>
    %187 = arith.index_cast %c12_i32 : i32 to index
    %188 = memref.load %arg3[%187] : memref<32xf32, #tpu.memory_space<smem>>
    %189 = vector.broadcast %188 : f32 to vector<1x8xf32>
    %190 = arith.addf %186, %189 : vector<1x8xf32>
    %cst_14 = arith.constant 0.000000e+00 : f32
    %191 = vector.broadcast %cst_14 : f32 to vector<1x8xf32>
    %192 = arith.maximumf %190, %191 : vector<1x8xf32>
    %193 = arith.index_cast %c12_i32 : i32 to index
    %194 = memref.load %arg4[%193] : memref<32xf32, #tpu.memory_space<smem>>
    %195 = vector.broadcast %194 : f32 to vector<1x8xf32>
    %196 = arith.mulf %195, %192 : vector<1x8xf32>
    %197 = arith.addf %182, %196 : vector<1x8xf32>
    %c13_i32 = arith.constant 13 : i32
    %198 = arith.index_cast %c13_i32 : i32 to index
    %199 = memref.load %arg2[%198] : memref<32xf32, #tpu.memory_space<smem>>
    %200 = vector.broadcast %199 : f32 to vector<1x8xf32>
    %201 = arith.mulf %200, %1 : vector<1x8xf32>
    %202 = arith.index_cast %c13_i32 : i32 to index
    %203 = memref.load %arg3[%202] : memref<32xf32, #tpu.memory_space<smem>>
    %204 = vector.broadcast %203 : f32 to vector<1x8xf32>
    %205 = arith.addf %201, %204 : vector<1x8xf32>
    %cst_15 = arith.constant 0.000000e+00 : f32
    %206 = vector.broadcast %cst_15 : f32 to vector<1x8xf32>
    %207 = arith.maximumf %205, %206 : vector<1x8xf32>
    %208 = arith.index_cast %c13_i32 : i32 to index
    %209 = memref.load %arg4[%208] : memref<32xf32, #tpu.memory_space<smem>>
    %210 = vector.broadcast %209 : f32 to vector<1x8xf32>
    %211 = arith.mulf %210, %207 : vector<1x8xf32>
    %212 = arith.addf %197, %211 : vector<1x8xf32>
    %c14_i32 = arith.constant 14 : i32
    %213 = arith.index_cast %c14_i32 : i32 to index
    %214 = memref.load %arg2[%213] : memref<32xf32, #tpu.memory_space<smem>>
    %215 = vector.broadcast %214 : f32 to vector<1x8xf32>
    %216 = arith.mulf %215, %1 : vector<1x8xf32>
    %217 = arith.index_cast %c14_i32 : i32 to index
    %218 = memref.load %arg3[%217] : memref<32xf32, #tpu.memory_space<smem>>
    %219 = vector.broadcast %218 : f32 to vector<1x8xf32>
    %220 = arith.addf %216, %219 : vector<1x8xf32>
    %cst_16 = arith.constant 0.000000e+00 : f32
    %221 = vector.broadcast %cst_16 : f32 to vector<1x8xf32>
    %222 = arith.maximumf %220, %221 : vector<1x8xf32>
    %223 = arith.index_cast %c14_i32 : i32 to index
    %224 = memref.load %arg4[%223] : memref<32xf32, #tpu.memory_space<smem>>
    %225 = vector.broadcast %224 : f32 to vector<1x8xf32>
    %226 = arith.mulf %225, %222 : vector<1x8xf32>
    %227 = arith.addf %212, %226 : vector<1x8xf32>
    %c15_i32 = arith.constant 15 : i32
    %228 = arith.index_cast %c15_i32 : i32 to index
    %229 = memref.load %arg2[%228] : memref<32xf32, #tpu.memory_space<smem>>
    %230 = vector.broadcast %229 : f32 to vector<1x8xf32>
    %231 = arith.mulf %230, %1 : vector<1x8xf32>
    %232 = arith.index_cast %c15_i32 : i32 to index
    %233 = memref.load %arg3[%232] : memref<32xf32, #tpu.memory_space<smem>>
    %234 = vector.broadcast %233 : f32 to vector<1x8xf32>
    %235 = arith.addf %231, %234 : vector<1x8xf32>
    %cst_17 = arith.constant 0.000000e+00 : f32
    %236 = vector.broadcast %cst_17 : f32 to vector<1x8xf32>
    %237 = arith.maximumf %235, %236 : vector<1x8xf32>
    %238 = arith.index_cast %c15_i32 : i32 to index
    %239 = memref.load %arg4[%238] : memref<32xf32, #tpu.memory_space<smem>>
    %240 = vector.broadcast %239 : f32 to vector<1x8xf32>
    %241 = arith.mulf %240, %237 : vector<1x8xf32>
    %242 = arith.addf %227, %241 : vector<1x8xf32>
    %c16_i32 = arith.constant 16 : i32
    %243 = arith.index_cast %c16_i32 : i32 to index
    %244 = memref.load %arg2[%243] : memref<32xf32, #tpu.memory_space<smem>>
    %245 = vector.broadcast %244 : f32 to vector<1x8xf32>
    %246 = arith.mulf %245, %1 : vector<1x8xf32>
    %247 = arith.index_cast %c16_i32 : i32 to index
    %248 = memref.load %arg3[%247] : memref<32xf32, #tpu.memory_space<smem>>
    %249 = vector.broadcast %248 : f32 to vector<1x8xf32>
    %250 = arith.addf %246, %249 : vector<1x8xf32>
    %cst_18 = arith.constant 0.000000e+00 : f32
    %251 = vector.broadcast %cst_18 : f32 to vector<1x8xf32>
    %252 = arith.maximumf %250, %251 : vector<1x8xf32>
    %253 = arith.index_cast %c16_i32 : i32 to index
    %254 = memref.load %arg4[%253] : memref<32xf32, #tpu.memory_space<smem>>
    %255 = vector.broadcast %254 : f32 to vector<1x8xf32>
    %256 = arith.mulf %255, %252 : vector<1x8xf32>
    %257 = arith.addf %242, %256 : vector<1x8xf32>
    %c17_i32 = arith.constant 17 : i32
    %258 = arith.index_cast %c17_i32 : i32 to index
    %259 = memref.load %arg2[%258] : memref<32xf32, #tpu.memory_space<smem>>
    %260 = vector.broadcast %259 : f32 to vector<1x8xf32>
    %261 = arith.mulf %260, %1 : vector<1x8xf32>
    %262 = arith.index_cast %c17_i32 : i32 to index
    %263 = memref.load %arg3[%262] : memref<32xf32, #tpu.memory_space<smem>>
    %264 = vector.broadcast %263 : f32 to vector<1x8xf32>
    %265 = arith.addf %261, %264 : vector<1x8xf32>
    %cst_19 = arith.constant 0.000000e+00 : f32
    %266 = vector.broadcast %cst_19 : f32 to vector<1x8xf32>
    %267 = arith.maximumf %265, %266 : vector<1x8xf32>
    %268 = arith.index_cast %c17_i32 : i32 to index
    %269 = memref.load %arg4[%268] : memref<32xf32, #tpu.memory_space<smem>>
    %270 = vector.broadcast %269 : f32 to vector<1x8xf32>
    %271 = arith.mulf %270, %267 : vector<1x8xf32>
    %272 = arith.addf %257, %271 : vector<1x8xf32>
    %c18_i32 = arith.constant 18 : i32
    %273 = arith.index_cast %c18_i32 : i32 to index
    %274 = memref.load %arg2[%273] : memref<32xf32, #tpu.memory_space<smem>>
    %275 = vector.broadcast %274 : f32 to vector<1x8xf32>
    %276 = arith.mulf %275, %1 : vector<1x8xf32>
    %277 = arith.index_cast %c18_i32 : i32 to index
    %278 = memref.load %arg3[%277] : memref<32xf32, #tpu.memory_space<smem>>
    %279 = vector.broadcast %278 : f32 to vector<1x8xf32>
    %280 = arith.addf %276, %279 : vector<1x8xf32>
    %cst_20 = arith.constant 0.000000e+00 : f32
    %281 = vector.broadcast %cst_20 : f32 to vector<1x8xf32>
    %282 = arith.maximumf %280, %281 : vector<1x8xf32>
    %283 = arith.index_cast %c18_i32 : i32 to index
    %284 = memref.load %arg4[%283] : memref<32xf32, #tpu.memory_space<smem>>
    %285 = vector.broadcast %284 : f32 to vector<1x8xf32>
    %286 = arith.mulf %285, %282 : vector<1x8xf32>
    %287 = arith.addf %272, %286 : vector<1x8xf32>
    %c19_i32 = arith.constant 19 : i32
    %288 = arith.index_cast %c19_i32 : i32 to index
    %289 = memref.load %arg2[%288] : memref<32xf32, #tpu.memory_space<smem>>
    %290 = vector.broadcast %289 : f32 to vector<1x8xf32>
    %291 = arith.mulf %290, %1 : vector<1x8xf32>
    %292 = arith.index_cast %c19_i32 : i32 to index
    %293 = memref.load %arg3[%292] : memref<32xf32, #tpu.memory_space<smem>>
    %294 = vector.broadcast %293 : f32 to vector<1x8xf32>
    %295 = arith.addf %291, %294 : vector<1x8xf32>
    %cst_21 = arith.constant 0.000000e+00 : f32
    %296 = vector.broadcast %cst_21 : f32 to vector<1x8xf32>
    %297 = arith.maximumf %295, %296 : vector<1x8xf32>
    %298 = arith.index_cast %c19_i32 : i32 to index
    %299 = memref.load %arg4[%298] : memref<32xf32, #tpu.memory_space<smem>>
    %300 = vector.broadcast %299 : f32 to vector<1x8xf32>
    %301 = arith.mulf %300, %297 : vector<1x8xf32>
    %302 = arith.addf %287, %301 : vector<1x8xf32>
    %c20_i32 = arith.constant 20 : i32
    %303 = arith.index_cast %c20_i32 : i32 to index
    %304 = memref.load %arg2[%303] : memref<32xf32, #tpu.memory_space<smem>>
    %305 = vector.broadcast %304 : f32 to vector<1x8xf32>
    %306 = arith.mulf %305, %1 : vector<1x8xf32>
    %307 = arith.index_cast %c20_i32 : i32 to index
    %308 = memref.load %arg3[%307] : memref<32xf32, #tpu.memory_space<smem>>
    %309 = vector.broadcast %308 : f32 to vector<1x8xf32>
    %310 = arith.addf %306, %309 : vector<1x8xf32>
    %cst_22 = arith.constant 0.000000e+00 : f32
    %311 = vector.broadcast %cst_22 : f32 to vector<1x8xf32>
    %312 = arith.maximumf %310, %311 : vector<1x8xf32>
    %313 = arith.index_cast %c20_i32 : i32 to index
    %314 = memref.load %arg4[%313] : memref<32xf32, #tpu.memory_space<smem>>
    %315 = vector.broadcast %314 : f32 to vector<1x8xf32>
    %316 = arith.mulf %315, %312 : vector<1x8xf32>
    %317 = arith.addf %302, %316 : vector<1x8xf32>
    %c21_i32 = arith.constant 21 : i32
    %318 = arith.index_cast %c21_i32 : i32 to index
    %319 = memref.load %arg2[%318] : memref<32xf32, #tpu.memory_space<smem>>
    %320 = vector.broadcast %319 : f32 to vector<1x8xf32>
    %321 = arith.mulf %320, %1 : vector<1x8xf32>
    %322 = arith.index_cast %c21_i32 : i32 to index
    %323 = memref.load %arg3[%322] : memref<32xf32, #tpu.memory_space<smem>>
    %324 = vector.broadcast %323 : f32 to vector<1x8xf32>
    %325 = arith.addf %321, %324 : vector<1x8xf32>
    %cst_23 = arith.constant 0.000000e+00 : f32
    %326 = vector.broadcast %cst_23 : f32 to vector<1x8xf32>
    %327 = arith.maximumf %325, %326 : vector<1x8xf32>
    %328 = arith.index_cast %c21_i32 : i32 to index
    %329 = memref.load %arg4[%328] : memref<32xf32, #tpu.memory_space<smem>>
    %330 = vector.broadcast %329 : f32 to vector<1x8xf32>
    %331 = arith.mulf %330, %327 : vector<1x8xf32>
    %332 = arith.addf %317, %331 : vector<1x8xf32>
    %c22_i32 = arith.constant 22 : i32
    %333 = arith.index_cast %c22_i32 : i32 to index
    %334 = memref.load %arg2[%333] : memref<32xf32, #tpu.memory_space<smem>>
    %335 = vector.broadcast %334 : f32 to vector<1x8xf32>
    %336 = arith.mulf %335, %1 : vector<1x8xf32>
    %337 = arith.index_cast %c22_i32 : i32 to index
    %338 = memref.load %arg3[%337] : memref<32xf32, #tpu.memory_space<smem>>
    %339 = vector.broadcast %338 : f32 to vector<1x8xf32>
    %340 = arith.addf %336, %339 : vector<1x8xf32>
    %cst_24 = arith.constant 0.000000e+00 : f32
    %341 = vector.broadcast %cst_24 : f32 to vector<1x8xf32>
    %342 = arith.maximumf %340, %341 : vector<1x8xf32>
    %343 = arith.index_cast %c22_i32 : i32 to index
    %344 = memref.load %arg4[%343] : memref<32xf32, #tpu.memory_space<smem>>
    %345 = vector.broadcast %344 : f32 to vector<1x8xf32>
    %346 = arith.mulf %345, %342 : vector<1x8xf32>
    %347 = arith.addf %332, %346 : vector<1x8xf32>
    %c23_i32 = arith.constant 23 : i32
    %348 = arith.index_cast %c23_i32 : i32 to index
    %349 = memref.load %arg2[%348] : memref<32xf32, #tpu.memory_space<smem>>
    %350 = vector.broadcast %349 : f32 to vector<1x8xf32>
    %351 = arith.mulf %350, %1 : vector<1x8xf32>
    %352 = arith.index_cast %c23_i32 : i32 to index
    %353 = memref.load %arg3[%352] : memref<32xf32, #tpu.memory_space<smem>>
    %354 = vector.broadcast %353 : f32 to vector<1x8xf32>
    %355 = arith.addf %351, %354 : vector<1x8xf32>
    %cst_25 = arith.constant 0.000000e+00 : f32
    %356 = vector.broadcast %cst_25 : f32 to vector<1x8xf32>
    %357 = arith.maximumf %355, %356 : vector<1x8xf32>
    %358 = arith.index_cast %c23_i32 : i32 to index
    %359 = memref.load %arg4[%358] : memref<32xf32, #tpu.memory_space<smem>>
    %360 = vector.broadcast %359 : f32 to vector<1x8xf32>
    %361 = arith.mulf %360, %357 : vector<1x8xf32>
    %362 = arith.addf %347, %361 : vector<1x8xf32>
    %c24_i32 = arith.constant 24 : i32
    %363 = arith.index_cast %c24_i32 : i32 to index
    %364 = memref.load %arg2[%363] : memref<32xf32, #tpu.memory_space<smem>>
    %365 = vector.broadcast %364 : f32 to vector<1x8xf32>
    %366 = arith.mulf %365, %1 : vector<1x8xf32>
    %367 = arith.index_cast %c24_i32 : i32 to index
    %368 = memref.load %arg3[%367] : memref<32xf32, #tpu.memory_space<smem>>
    %369 = vector.broadcast %368 : f32 to vector<1x8xf32>
    %370 = arith.addf %366, %369 : vector<1x8xf32>
    %cst_26 = arith.constant 0.000000e+00 : f32
    %371 = vector.broadcast %cst_26 : f32 to vector<1x8xf32>
    %372 = arith.maximumf %370, %371 : vector<1x8xf32>
    %373 = arith.index_cast %c24_i32 : i32 to index
    %374 = memref.load %arg4[%373] : memref<32xf32, #tpu.memory_space<smem>>
    %375 = vector.broadcast %374 : f32 to vector<1x8xf32>
    %376 = arith.mulf %375, %372 : vector<1x8xf32>
    %377 = arith.addf %362, %376 : vector<1x8xf32>
    %c25_i32 = arith.constant 25 : i32
    %378 = arith.index_cast %c25_i32 : i32 to index
    %379 = memref.load %arg2[%378] : memref<32xf32, #tpu.memory_space<smem>>
    %380 = vector.broadcast %379 : f32 to vector<1x8xf32>
    %381 = arith.mulf %380, %1 : vector<1x8xf32>
    %382 = arith.index_cast %c25_i32 : i32 to index
    %383 = memref.load %arg3[%382] : memref<32xf32, #tpu.memory_space<smem>>
    %384 = vector.broadcast %383 : f32 to vector<1x8xf32>
    %385 = arith.addf %381, %384 : vector<1x8xf32>
    %cst_27 = arith.constant 0.000000e+00 : f32
    %386 = vector.broadcast %cst_27 : f32 to vector<1x8xf32>
    %387 = arith.maximumf %385, %386 : vector<1x8xf32>
    %388 = arith.index_cast %c25_i32 : i32 to index
    %389 = memref.load %arg4[%388] : memref<32xf32, #tpu.memory_space<smem>>
    %390 = vector.broadcast %389 : f32 to vector<1x8xf32>
    %391 = arith.mulf %390, %387 : vector<1x8xf32>
    %392 = arith.addf %377, %391 : vector<1x8xf32>
    %c26_i32 = arith.constant 26 : i32
    %393 = arith.index_cast %c26_i32 : i32 to index
    %394 = memref.load %arg2[%393] : memref<32xf32, #tpu.memory_space<smem>>
    %395 = vector.broadcast %394 : f32 to vector<1x8xf32>
    %396 = arith.mulf %395, %1 : vector<1x8xf32>
    %397 = arith.index_cast %c26_i32 : i32 to index
    %398 = memref.load %arg3[%397] : memref<32xf32, #tpu.memory_space<smem>>
    %399 = vector.broadcast %398 : f32 to vector<1x8xf32>
    %400 = arith.addf %396, %399 : vector<1x8xf32>
    %cst_28 = arith.constant 0.000000e+00 : f32
    %401 = vector.broadcast %cst_28 : f32 to vector<1x8xf32>
    %402 = arith.maximumf %400, %401 : vector<1x8xf32>
    %403 = arith.index_cast %c26_i32 : i32 to index
    %404 = memref.load %arg4[%403] : memref<32xf32, #tpu.memory_space<smem>>
    %405 = vector.broadcast %404 : f32 to vector<1x8xf32>
    %406 = arith.mulf %405, %402 : vector<1x8xf32>
    %407 = arith.addf %392, %406 : vector<1x8xf32>
    %c27_i32 = arith.constant 27 : i32
    %408 = arith.index_cast %c27_i32 : i32 to index
    %409 = memref.load %arg2[%408] : memref<32xf32, #tpu.memory_space<smem>>
    %410 = vector.broadcast %409 : f32 to vector<1x8xf32>
    %411 = arith.mulf %410, %1 : vector<1x8xf32>
    %412 = arith.index_cast %c27_i32 : i32 to index
    %413 = memref.load %arg3[%412] : memref<32xf32, #tpu.memory_space<smem>>
    %414 = vector.broadcast %413 : f32 to vector<1x8xf32>
    %415 = arith.addf %411, %414 : vector<1x8xf32>
    %cst_29 = arith.constant 0.000000e+00 : f32
    %416 = vector.broadcast %cst_29 : f32 to vector<1x8xf32>
    %417 = arith.maximumf %415, %416 : vector<1x8xf32>
    %418 = arith.index_cast %c27_i32 : i32 to index
    %419 = memref.load %arg4[%418] : memref<32xf32, #tpu.memory_space<smem>>
    %420 = vector.broadcast %419 : f32 to vector<1x8xf32>
    %421 = arith.mulf %420, %417 : vector<1x8xf32>
    %422 = arith.addf %407, %421 : vector<1x8xf32>
    %c28_i32 = arith.constant 28 : i32
    %423 = arith.index_cast %c28_i32 : i32 to index
    %424 = memref.load %arg2[%423] : memref<32xf32, #tpu.memory_space<smem>>
    %425 = vector.broadcast %424 : f32 to vector<1x8xf32>
    %426 = arith.mulf %425, %1 : vector<1x8xf32>
    %427 = arith.index_cast %c28_i32 : i32 to index
    %428 = memref.load %arg3[%427] : memref<32xf32, #tpu.memory_space<smem>>
    %429 = vector.broadcast %428 : f32 to vector<1x8xf32>
    %430 = arith.addf %426, %429 : vector<1x8xf32>
    %cst_30 = arith.constant 0.000000e+00 : f32
    %431 = vector.broadcast %cst_30 : f32 to vector<1x8xf32>
    %432 = arith.maximumf %430, %431 : vector<1x8xf32>
    %433 = arith.index_cast %c28_i32 : i32 to index
    %434 = memref.load %arg4[%433] : memref<32xf32, #tpu.memory_space<smem>>
    %435 = vector.broadcast %434 : f32 to vector<1x8xf32>
    %436 = arith.mulf %435, %432 : vector<1x8xf32>
    %437 = arith.addf %422, %436 : vector<1x8xf32>
    %c29_i32 = arith.constant 29 : i32
    %438 = arith.index_cast %c29_i32 : i32 to index
    %439 = memref.load %arg2[%438] : memref<32xf32, #tpu.memory_space<smem>>
    %440 = vector.broadcast %439 : f32 to vector<1x8xf32>
    %441 = arith.mulf %440, %1 : vector<1x8xf32>
    %442 = arith.index_cast %c29_i32 : i32 to index
    %443 = memref.load %arg3[%442] : memref<32xf32, #tpu.memory_space<smem>>
    %444 = vector.broadcast %443 : f32 to vector<1x8xf32>
    %445 = arith.addf %441, %444 : vector<1x8xf32>
    %cst_31 = arith.constant 0.000000e+00 : f32
    %446 = vector.broadcast %cst_31 : f32 to vector<1x8xf32>
    %447 = arith.maximumf %445, %446 : vector<1x8xf32>
    %448 = arith.index_cast %c29_i32 : i32 to index
    %449 = memref.load %arg4[%448] : memref<32xf32, #tpu.memory_space<smem>>
    %450 = vector.broadcast %449 : f32 to vector<1x8xf32>
    %451 = arith.mulf %450, %447 : vector<1x8xf32>
    %452 = arith.addf %437, %451 : vector<1x8xf32>
    %c30_i32 = arith.constant 30 : i32
    %453 = arith.index_cast %c30_i32 : i32 to index
    %454 = memref.load %arg2[%453] : memref<32xf32, #tpu.memory_space<smem>>
    %455 = vector.broadcast %454 : f32 to vector<1x8xf32>
    %456 = arith.mulf %455, %1 : vector<1x8xf32>
    %457 = arith.index_cast %c30_i32 : i32 to index
    %458 = memref.load %arg3[%457] : memref<32xf32, #tpu.memory_space<smem>>
    %459 = vector.broadcast %458 : f32 to vector<1x8xf32>
    %460 = arith.addf %456, %459 : vector<1x8xf32>
    %cst_32 = arith.constant 0.000000e+00 : f32
    %461 = vector.broadcast %cst_32 : f32 to vector<1x8xf32>
    %462 = arith.maximumf %460, %461 : vector<1x8xf32>
    %463 = arith.index_cast %c30_i32 : i32 to index
    %464 = memref.load %arg4[%463] : memref<32xf32, #tpu.memory_space<smem>>
    %465 = vector.broadcast %464 : f32 to vector<1x8xf32>
    %466 = arith.mulf %465, %462 : vector<1x8xf32>
    %467 = arith.addf %452, %466 : vector<1x8xf32>
    %c31_i32 = arith.constant 31 : i32
    %468 = arith.index_cast %c31_i32 : i32 to index
    %469 = memref.load %arg2[%468] : memref<32xf32, #tpu.memory_space<smem>>
    %470 = vector.broadcast %469 : f32 to vector<1x8xf32>
    %471 = arith.mulf %470, %1 : vector<1x8xf32>
    %472 = arith.index_cast %c31_i32 : i32 to index
    %473 = memref.load %arg3[%472] : memref<32xf32, #tpu.memory_space<smem>>
    %474 = vector.broadcast %473 : f32 to vector<1x8xf32>
    %475 = arith.addf %471, %474 : vector<1x8xf32>
    %cst_33 = arith.constant 0.000000e+00 : f32
    %476 = vector.broadcast %cst_33 : f32 to vector<1x8xf32>
    %477 = arith.maximumf %475, %476 : vector<1x8xf32>
    %478 = arith.index_cast %c31_i32 : i32 to index
    %479 = memref.load %arg4[%478] : memref<32xf32, #tpu.memory_space<smem>>
    %480 = vector.broadcast %479 : f32 to vector<1x8xf32>
    %481 = arith.mulf %480, %477 : vector<1x8xf32>
    %482 = arith.addf %467, %481 : vector<1x8xf32>
    %c32_i32 = arith.constant 32 : i32
    %483 = vector.broadcast %0 : f32 to vector<1x8xf32>
    %484 = arith.addf %482, %483 : vector<1x8xf32>
    %c0_34 = arith.constant 0 : index
    %c0_35 = arith.constant 0 : index
    %485 = vector.load %arg6[%c0_34, %c0_35] : memref<1x8xf32, #tpu.memory_space<vmem>>, vector<1x8xf32>
    tpu.vector_store %arg6[%c0_34, %c0_35], %484 {strides = array<i32>} : memref<1x8xf32, #tpu.memory_space<vmem>>, vector<1x8xf32>,
    return
  }
  func.func @transform_0(%arg0: i32) -> (i32, i32) {
    %c0_i32 = arith.constant 0 : i32
    %c0_i32_0 = arith.constant 0 : i32
    return %arg0, %c0_i32 : i32, i32
  }
  func.func @transform_1(%arg0: i32) -> i32 {
    %c0_i32 = arith.constant 0 : i32
    %c0_i32_0 = arith.constant 0 : i32
    return %c0_i32 : i32
  }
  func.func @transform_2(%arg0: i32) -> i32 {
    %c0_i32 = arith.constant 0 : i32
    %c0_i32_0 = arith.constant 0 : i32
    return %c0_i32 : i32
  }
  func.func @transform_3(%arg0: i32) -> i32 {
    %c0_i32 = arith.constant 0 : i32
    %c0_i32_0 = arith.constant 0 : i32
    return %c0_i32 : i32
  }
  func.func @transform_4(%arg0: i32) -> i32 {
    %c0_i32 = arith.constant 0 : i32
    %c0_i32_0 = arith.constant 0 : i32
    return %c0_i32 : i32
  }
  func.func @transform_5(%arg0: i32) -> (i32, i32) {
    %c0_i32 = arith.constant 0 : i32
    %c0_i32_0 = arith.constant 0 : i32
    return %arg0, %c0_i32 : i32, i32
  }
}

</mosaic_0001>

<llo_original>
// kernel: tpu_custom_call.1
$region0: #{tpu_custom_call.1}
  #allocation0 [shape = 'u32[]', space=smem, size = 0x4, offset = 0x4, fixed_abs, tag = 'smem constant byte address 0x4 - core index']
  #allocation1 [shape = 'u32[72,128]{1,0:T(1,128)}', space=vmem, size = 0x9000, scoped, tag = 'internal scratch']
  #allocation2 [shape = 'f32[1]{0:T(128)S(6)}', space=smem, size = 0x200, scoped, tag = 'scoped memory for tpu_custom_call.1']
  %s0 = inlined_call_operand.vmem [shape: f32[1,8], index: 0, kind: input, shape index: {}]
  %s1 = inlined_call_operand.vmem [shape: f32[32], index: 1, kind: input, shape index: {}]
  %s2 = inlined_call_operand.vmem [shape: f32[32], index: 2, kind: input, shape index: {}]
  %s3 = inlined_call_operand.vmem [shape: f32[32], index: 3, kind: input, shape index: {}]
  %s4 = inlined_call_operand.<no memory space> [shape: f32[1], index: 4, kind: input, shape index: {}]
  %s5 = inlined_call_operand.hbm [shape: f32[1,8], index: 5, kind: output, shape index: {}]
  %s6 = sld [smem:[#allocation0]]
  $region42: #{tpu_custom_call.1} parent=0
    _
  %s8 = ssub.s32 1, %s6
  %s9 = scalar_select 0, %s8, %s6
  %10 = sst [smem:[#allocation2]] %s4
  $region1: #{tpu_custom_call.1} parent=0
    #allocation3 [shape = 'u8[512]{0}', space=smem, size = 0x200, scoped, tag = 'input window, operand 1, single buffered']
    #allocation4 [shape = 's32[1]{0}', space=sflag, size = 0x4, scoped, tag = 'scoped memory for tpu_custom_call.1']
    #allocation5 [shape = 's32[1]{0}', space=sflag, size = 0x4, scoped, tag = 'scoped memory for tpu_custom_call.1']
    #allocation6 [shape = 'u8[512]{0}', space=smem, size = 0x200, scoped, tag = 'input window, operand 2, single buffered']
    #allocation7 [shape = 's32[1]{0}', space=sflag, size = 0x4, scoped, tag = 'scoped memory for tpu_custom_call.1']
    #allocation8 [shape = 'u8[512]{0}', space=smem, size = 0x200, scoped, tag = 'input window, operand 3, single buffered']
    #allocation9 [shape = 'u8[512]{0}', space=vmem, size = 0x400, scoped, tag = 'output window, operand 0, single buffered']
    %11 = vsyncpa [#allocation5], 0
    %12 = vsyncpa [#allocation7], 0
    %13 = vsyncpa [#allocation4], 0
    // Predicated region
    $region2: #{tpu_custom_call.1} parent=1 // pred_check
      _
    $region3: #{tpu_custom_call.1} parent=1 // pred_check_branch
      %15 = sbr.rel (0) target = $region5
    $region4: #{tpu_custom_call.1} parent=1 // pred_region
      _
    $region5: #{tpu_custom_call.1} parent=1 // pred_fallthru
      _
    // Predicated region
    $region6: #{tpu_custom_call.1} parent=1 // pred_check
      _
    $region7: #{tpu_custom_call.1} parent=1 // pred_check_branch
      %17 = sbr.rel (0) target = $region9
    $region8: #{tpu_custom_call.1} parent=1 // pred_region
      %19 = vsyncadd [#allocation5], 0
      %s21 = sshll.u32 %s1, 4
      %s22 = int_to_ptr.vmem [resolvable:$true] %s21
      %24 = dma.vmem_to_smem %s22, 16, [#allocation3], [#allocation5]
    $region9: #{tpu_custom_call.1} parent=1 // pred_fallthru
      _
    // Predicated region
    $region10: #{tpu_custom_call.1} parent=1 // pred_check
      _
    $region11: #{tpu_custom_call.1} parent=1 // pred_check_branch
      %26 = sbr.rel (0) target = $region13
    $region12: #{tpu_custom_call.1} parent=1 // pred_region
      %28 = vsyncadd [#allocation7], 0
      %s30 = sshll.u32 %s2, 4
      %s31 = int_to_ptr.vmem [resolvable:$true] %s30
      %33 = dma.vmem_to_smem %s31, 16, [#allocation6], [#allocation7]
    $region13: #{tpu_custom_call.1} parent=1 // pred_fallthru
      _
    // Predicated region
    $region14: #{tpu_custom_call.1} parent=1 // pred_check
      _
    $region15: #{tpu_custom_call.1} parent=1 // pred_check_branch
      %35 = sbr.rel (0) target = $region17
    $region16: #{tpu_custom_call.1} parent=1 // pred_region
      %37 = vsyncadd [#allocation7], 0
      %s39 = sshll.u32 %s3, 4
      %s40 = int_to_ptr.vmem [resolvable:$true] %s39
      %42 = dma.vmem_to_smem %s40, 16, [#allocation8], [#allocation7]
    $region17: #{tpu_custom_call.1} parent=1 // pred_fallthru
      _
    // Predicated region
    $region18: #{tpu_custom_call.1} parent=1 // pred_check
      _
    $region19: #{tpu_custom_call.1} parent=1 // pred_check_branch
      %44 = sbr.rel (0) target = $region21
    $region20: #{tpu_custom_call.1} parent=1 // pred_region
      _
    $region21: #{tpu_custom_call.1} parent=1 // pred_fallthru
      _
    // Predicated region
    $region22: #{tpu_custom_call.1} parent=1 // pred_check
      _
    $region23: #{tpu_custom_call.1} parent=1 // pred_check_branch
      %46 = sbr.rel (0) target = $region25
    $region24: #{tpu_custom_call.1} parent=1 // pred_region
      %48 = dma.done [#allocation5], 16
    $region25: #{tpu_custom_call.1} parent=1 // pred_fallthru
      _
    // Predicated region
    $region26: #{tpu_custom_call.1} parent=1 // pred_check
      _
    $region27: #{tpu_custom_call.1} parent=1 // pred_check_branch
      %50 = sbr.rel (0) target = $region29
    $region28: #{tpu_custom_call.1} parent=1 // pred_region
      %52 = dma.done [#allocation7], 16
    $region29: #{tpu_custom_call.1} parent=1 // pred_fallthru
      _
    // Predicated region
    $region30: #{tpu_custom_call.1} parent=1 // pred_check
      _
    $region31: #{tpu_custom_call.1} parent=1 // pred_check_branch
      %54 = sbr.rel (0) target = $region33
    $region32: #{tpu_custom_call.1} parent=1 // pred_region
      %56 = dma.done [#allocation7], 16
    $region33: #{tpu_custom_call.1} parent=1 // pred_fallthru
      _
    %57 = sfence
    %s58 = sld [smem:[#allocation2]]
    %v59 = vld [vmem:[%s0] sm:$0x1]
    %s60 = sld [smem:[#allocation3]]
    %v61 = vstv %s60
    %v62 = vmul.f32 %v61, %v59
    %s63 = sld [smem:[#allocation6]]
    %v64 = vstv %s63
    %v65 = vadd.f32 %v62, %v64
    %v66 = vmax.f32 %v65, 0.0
    %s67 = sld [smem:[#allocation8]]
    %v68 = vstv %s67
    %v69 = vmul.f32 %v68, %v66
    %v70 = vadd.f32 %v69, 0.0
    %s71 = sld [smem:[#allocation3 + $0x1]]
    %v72 = vstv %s71
    %v73 = vmul.f32 %v72, %v59
    %s74 = sld [smem:[#allocation6 + $0x1]]
    %v75 = vstv %s74
    %v76 = vadd.f32 %v73, %v75
    %v77 = vmax.f32 %v76, 0.0
    %s78 = sld [smem:[#allocation8 + $0x1]]
    %v79 = vstv %s78
    %v80 = vmul.f32 %v79, %v77
    %v81 = vadd.f32 %v70, %v80
    %s82 = sld [smem:[#allocation3 + $0x2]]
    %v83 = vstv %s82
    %v84 = vmul.f32 %v83, %v59
    %s85 = sld [smem:[#allocation6 + $0x2]]
    %v86 = vstv %s85
    %v87 = vadd.f32 %v84, %v86
    %v88 = vmax.f32 %v87, 0.0
    %s89 = sld [smem:[#allocation8 + $0x2]]
    %v90 = vstv %s89
    %v91 = vmul.f32 %v90, %v88
    %v92 = vadd.f32 %v81, %v91
    %s93 = sld [smem:[#allocation3 + $0x3]]
    %v94 = vstv %s93
    %v95 = vmul.f32 %v94, %v59
    %s96 = sld [smem:[#allocation6 + $0x3]]
    %v97 = vstv %s96
    %v98 = vadd.f32 %v95, %v97
    %v99 = vmax.f32 %v98, 0.0
    %s100 = sld [smem:[#allocation8 + $0x3]]
    %v101 = vstv %s100
    %v102 = vmul.f32 %v101, %v99
    %v103 = vadd.f32 %v92, %v102
    %s104 = sld [smem:[#allocation3 + $0x4]]
    %v105 = vstv %s104
    %v106 = vmul.f32 %v105, %v59
    %s107 = sld [smem:[#allocation6 + $0x4]]
    %v108 = vstv %s107
    %v109 = vadd.f32 %v106, %v108
    %v110 = vmax.f32 %v109, 0.0
    %s111 = sld [smem:[#allocation8 + $0x4]]
    %v112 = vstv %s111
    %v113 = vmul.f32 %v112, %v110
    %v114 = vadd.f32 %v103, %v113
    %s115 = sld [smem:[#allocation3 + $0x5]]
    %v116 = vstv %s115
    %v117 = vmul.f32 %v116, %v59
    %s118 = sld [smem:[#allocation6 + $0x5]]
    %v119 = vstv %s118
    %v120 = vadd.f32 %v117, %v119
    %v121 = vmax.f32 %v120, 0.0
    %s122 = sld [smem:[#allocation8 + $0x5]]
    %v123 = vstv %s122
    %v124 = vmul.f32 %v123, %v121
    %v125 = vadd.f32 %v114, %v124
    %s126 = sld [smem:[#allocation3 + $0x6]]
    %v127 = vstv %s126
    %v128 = vmul.f32 %v127, %v59
    %s129 = sld [smem:[#allocation6 + $0x6]]
    %v130 = vstv %s129
    %v131 = vadd.f32 %v128, %v130
    %v132 = vmax.f32 %v131, 0.0
    %s133 = sld [smem:[#allocation8 + $0x6]]
    %v134 = vstv %s133
    %v135 = vmul.f32 %v134, %v132
    %v136 = vadd.f32 %v125, %v135
    %s137 = sld [smem:[#allocation3 + $0x7]]
    %v138 = vstv %s137
    %v139 = vmul.f32 %v138, %v59
    %s140 = sld [smem:[#allocation6 + $0x7]]
    %v141 = vstv %s140
    %v142 = vadd.f32 %v139, %v141
    %v143 = vmax.f32 %v142, 0.0
    %s144 = sld [smem:[#allocation8 + $0x7]]
    %v145 = vstv %s144
    %v146 = vmul.f32 %v145, %v143
    %v147 = vadd.f32 %v136, %v146
    %s148 = sld [smem:[#allocation3 + $0x8]]
    %v149 = vstv %s148
    %v150 = vmul.f32 %v149, %v59
    %s151 = sld [smem:[#allocation6 + $0x8]]
    %v152 = vstv %s151
    %v153 = vadd.f32 %v150, %v152
    %v154 = vmax.f32 %v153, 0.0
    %s155 = sld [smem:[#allocation8 + $0x8]]
    %v156 = vstv %s155
    %v157 = vmul.f32 %v156, %v154
    %v158 = vadd.f32 %v147, %v157
    %s159 = sld [smem:[#allocation3 + $0x9]]
    %v160 = vstv %s159
    %v161 = vmul.f32 %v160, %v59
    %s162 = sld [smem:[#allocation6 + $0x9]]
    %v163 = vstv %s162
    %v164 = vadd.f32 %v161, %v163
    %v165 = vmax.f32 %v164, 0.0
    %s166 = sld [smem:[#allocation8 + $0x9]]
    %v167 = vstv %s166
    %v168 = vmul.f32 %v167, %v165
    %v169 = vadd.f32 %v158, %v168
    %s170 = sld [smem:[#allocation3 + $0xa]]
    %v171 = vstv %s170
    %v172 = vmul.f32 %v171, %v59
    %s173 = sld [smem:[#allocation6 + $0xa]]
    %v174 = vstv %s173
    %v175 = vadd.f32 %v172, %v174
    %v176 = vmax.f32 %v175, 0.0
    %s177 = sld [smem:[#allocation8 + $0xa]]
    %v178 = vstv %s177
    %v179 = vmul.f32 %v178, %v176
    %v180 = vadd.f32 %v169, %v179
    %s181 = sld [smem:[#allocation3 + $0xb]]
    %v182 = vstv %s181
    %v183 = vmul.f32 %v182, %v59
    %s184 = sld [smem:[#allocation6 + $0xb]]
    %v185 = vstv %s184
    %v186 = vadd.f32 %v183, %v185
    %v187 = vmax.f32 %v186, 0.0
    %s188 = sld [smem:[#allocation8 + $0xb]]
    %v189 = vstv %s188
    %v190 = vmul.f32 %v189, %v187
    %v191 = vadd.f32 %v180, %v190
    %s192 = sld [smem:[#allocation3 + $0xc]]
    %v193 = vstv %s192
    %v194 = vmul.f32 %v193, %v59
    %s195 = sld [smem:[#allocation6 + $0xc]]
    %v196 = vstv %s195
    %v197 = vadd.f32 %v194, %v196
    %v198 = vmax.f32 %v197, 0.0
    %s199 = sld [smem:[#allocation8 + $0xc]]
    %v200 = vstv %s199
    %v201 = vmul.f32 %v200, %v198
    %v202 = vadd.f32 %v191, %v201
    %s203 = sld [smem:[#allocation3 + $0xd]]
    %v204 = vstv %s203
    %v205 = vmul.f32 %v204, %v59
    %s206 = sld [smem:[#allocation6 + $0xd]]
    %v207 = vstv %s206
    %v208 = vadd.f32 %v205, %v207
    %v209 = vmax.f32 %v208, 0.0
    %s210 = sld [smem:[#allocation8 + $0xd]]
    %v211 = vstv %s210
    %v212 = vmul.f32 %v211, %v209
    %v213 = vadd.f32 %v202, %v212
    %s214 = sld [smem:[#allocation3 + $0xe]]
    %v215 = vstv %s214
    %v216 = vmul.f32 %v215, %v59
    %s217 = sld [smem:[#allocation6 + $0xe]]
    %v218 = vstv %s217
    %v219 = vadd.f32 %v216, %v218
    %v220 = vmax.f32 %v219, 0.0
    %s221 = sld [smem:[#allocation8 + $0xe]]
    %v222 = vstv %s221
    %v223 = vmul.f32 %v222, %v220
    %v224 = vadd.f32 %v213, %v223
    %s225 = sld [smem:[#allocation3 + $0xf]]
    %v226 = vstv %s225
    %v227 = vmul.f32 %v226, %v59
    %s228 = sld [smem:[#allocation6 + $0xf]]
    %v229 = vstv %s228
    %v230 = vadd.f32 %v227, %v229
    %v231 = vmax.f32 %v230, 0.0
    %s232 = sld [smem:[#allocation8 + $0xf]]
    %v233 = vstv %s232
    %v234 = vmul.f32 %v233, %v231
    %v235 = vadd.f32 %v224, %v234
    %s236 = sld [smem:[#allocation3 + $0x10]]
    %v237 = vstv %s236
    %v238 = vmul.f32 %v237, %v59
    %s239 = sld [smem:[#allocation6 + $0x10]]
    %v240 = vstv %s239
    %v241 = vadd.f32 %v238, %v240
    %v242 = vmax.f32 %v241, 0.0
    %s243 = sld [smem:[#allocation8 + $0x10]]
    %v244 = vstv %s243
    %v245 = vmul.f32 %v244, %v242
    %v246 = vadd.f32 %v235, %v245
    %s247 = sld [smem:[#allocation3 + $0x11]]
    %v248 = vstv %s247
    %v249 = vmul.f32 %v248, %v59
    %s250 = sld [smem:[#allocation6 + $0x11]]
    %v251 = vstv %s250
    %v252 = vadd.f32 %v249, %v251
    %v253 = vmax.f32 %v252, 0.0
    %s254 = sld [smem:[#allocation8 + $0x11]]
    %v255 = vstv %s254
    %v256 = vmul.f32 %v255, %v253
    %v257 = vadd.f32 %v246, %v256
    %s258 = sld [smem:[#allocation3 + $0x12]]
    %v259 = vstv %s258
    %v260 = vmul.f32 %v259, %v59
    %s261 = sld [smem:[#allocation6 + $0x12]]
    %v262 = vstv %s261
    %v263 = vadd.f32 %v260, %v262
    %v264 = vmax.f32 %v263, 0.0
    %s265 = sld [smem:[#allocation8 + $0x12]]
    %v266 = vstv %s265
    %v267 = vmul.f32 %v266, %v264
    %v268 = vadd.f32 %v257, %v267
    %s269 = sld [smem:[#allocation3 + $0x13]]
    %v270 = vstv %s269
    %v271 = vmul.f32 %v270, %v59
    %s272 = sld [smem:[#allocation6 + $0x13]]
    %v273 = vstv %s272
    %v274 = vadd.f32 %v271, %v273
    %v275 = vmax.f32 %v274, 0.0
    %s276 = sld [smem:[#allocation8 + $0x13]]
    %v277 = vstv %s276
    %v278 = vmul.f32 %v277, %v275
    %v279 = vadd.f32 %v268, %v278
    %s280 = sld [smem:[#allocation3 + $0x14]]
    %v281 = vstv %s280
    %v282 = vmul.f32 %v281, %v59
    %s283 = sld [smem:[#allocation6 + $0x14]]
    %v284 = vstv %s283
    %v285 = vadd.f32 %v282, %v284
    %v286 = vmax.f32 %v285, 0.0
    %s287 = sld [smem:[#allocation8 + $0x14]]
    %v288 = vstv %s287
    %v289 = vmul.f32 %v288, %v286
    %v290 = vadd.f32 %v279, %v289
    %s291 = sld [smem:[#allocation3 + $0x15]]
    %v292 = vstv %s291
    %v293 = vmul.f32 %v292, %v59
    %s294 = sld [smem:[#allocation6 + $0x15]]
    %v295 = vstv %s294
    %v296 = vadd.f32 %v293, %v295
    %v297 = vmax.f32 %v296, 0.0
    %s298 = sld [smem:[#allocation8 + $0x15]]
    %v299 = vstv %s298
    %v300 = vmul.f32 %v299, %v297
    %v301 = vadd.f32 %v290, %v300
    %s302 = sld [smem:[#allocation3 + $0x16]]
    %v303 = vstv %s302
    %v304 = vmul.f32 %v303, %v59
    %s305 = sld [smem:[#allocation6 + $0x16]]
    %v306 = vstv %s305
    %v307 = vadd.f32 %v304, %v306
    %v308 = vmax.f32 %v307, 0.0
    %s309 = sld [smem:[#allocation8 + $0x16]]
    %v310 = vstv %s309
    %v311 = vmul.f32 %v310, %v308
    %v312 = vadd.f32 %v301, %v311
    %s313 = sld [smem:[#allocation3 + $0x17]]
    %v314 = vstv %s313
    %v315 = vmul.f32 %v314, %v59
    %s316 = sld [smem:[#allocation6 + $0x17]]
    %v317 = vstv %s316
    %v318 = vadd.f32 %v315, %v317
    %v319 = vmax.f32 %v318, 0.0
    %s320 = sld [smem:[#allocation8 + $0x17]]
    %v321 = vstv %s320
    %v322 = vmul.f32 %v321, %v319
    %v323 = vadd.f32 %v312, %v322
    %s324 = sld [smem:[#allocation3 + $0x18]]
    %v325 = vstv %s324
    %v326 = vmul.f32 %v325, %v59
    %s327 = sld [smem:[#allocation6 + $0x18]]
    %v328 = vstv %s327
    %v329 = vadd.f32 %v326, %v328
    %v330 = vmax.f32 %v329, 0.0
    %s331 = sld [smem:[#allocation8 + $0x18]]
    %v332 = vstv %s331
    %v333 = vmul.f32 %v332, %v330
    %v334 = vadd.f32 %v323, %v333
    %s335 = sld [smem:[#allocation3 + $0x19]]
    %v336 = vstv %s335
    %v337 = vmul.f32 %v336, %v59
    %s338 = sld [smem:[#allocation6 + $0x19]]
    %v339 = vstv %s338
    %v340 = vadd.f32 %v337, %v339
    %v341 = vmax.f32 %v340, 0.0
    %s342 = sld [smem:[#allocation8 + $0x19]]
    %v343 = vstv %s342
    %v344 = vmul.f32 %v343, %v341
    %v345 = vadd.f32 %v334, %v344
    %s346 = sld [smem:[#allocation3 + $0x1a]]
    %v347 = vstv %s346
    %v348 = vmul.f32 %v347, %v59
    %s349 = sld [smem:[#allocation6 + $0x1a]]
    %v350 = vstv %s349
    %v351 = vadd.f32 %v348, %v350
    %v352 = vmax.f32 %v351, 0.0
    %s353 = sld [smem:[#allocation8 + $0x1a]]
    %v354 = vstv %s353
    %v355 = vmul.f32 %v354, %v352
    %v356 = vadd.f32 %v345, %v355
    %s357 = sld [smem:[#allocation3 + $0x1b]]
    %v358 = vstv %s357
    %v359 = vmul.f32 %v358, %v59
    %s360 = sld [smem:[#allocation6 + $0x1b]]
    %v361 = vstv %s360
    %v362 = vadd.f32 %v359, %v361
    %v363 = vmax.f32 %v362, 0.0
    %s364 = sld [smem:[#allocation8 + $0x1b]]
    %v365 = vstv %s364
    %v366 = vmul.f32 %v365, %v363
    %v367 = vadd.f32 %v356, %v366
    %s368 = sld [smem:[#allocation3 + $0x1c]]
    %v369 = vstv %s368
    %v370 = vmul.f32 %v369, %v59
    %s371 = sld [smem:[#allocation6 + $0x1c]]
    %v372 = vstv %s371
    %v373 = vadd.f32 %v370, %v372
    %v374 = vmax.f32 %v373, 0.0
    %s375 = sld [smem:[#allocation8 + $0x1c]]
    %v376 = vstv %s375
    %v377 = vmul.f32 %v376, %v374
    %v378 = vadd.f32 %v367, %v377
    %s379 = sld [smem:[#allocation3 + $0x1d]]
    %v380 = vstv %s379
    %v381 = vmul.f32 %v380, %v59
    %s382 = sld [smem:[#allocation6 + $0x1d]]
    %v383 = vstv %s382
    %v384 = vadd.f32 %v381, %v383
    %v385 = vmax.f32 %v384, 0.0
    %s386 = sld [smem:[#allocation8 + $0x1d]]
    %v387 = vstv %s386
    %v388 = vmul.f32 %v387, %v385
    %v389 = vadd.f32 %v378, %v388
    %s390 = sld [smem:[#allocation3 + $0x1e]]
    %v391 = vstv %s390
    %v392 = vmul.f32 %v391, %v59
    %s393 = sld [smem:[#allocation6 + $0x1e]]
    %v394 = vstv %s393
    %v395 = vadd.f32 %v392, %v394
    %v396 = vmax.f32 %v395, 0.0
    %s397 = sld [smem:[#allocation8 + $0x1e]]
    %v398 = vstv %s397
    %v399 = vmul.f32 %v398, %v396
    %v400 = vadd.f32 %v389, %v399
    %s401 = sld [smem:[#allocation3 + $0x1f]]
    %v402 = vstv %s401
    %v403 = vmul.f32 %v402, %v59
    %s404 = sld [smem:[#allocation6 + $0x1f]]
    %v405 = vstv %s404
    %v406 = vadd.f32 %v403, %v405
    %v407 = vmax.f32 %v406, 0.0
    %s408 = sld [smem:[#allocation8 + $0x1f]]
    %v409 = vstv %s408
    %v410 = vmul.f32 %v409, %v407
    %v411 = vadd.f32 %v400, %v410
    %v412 = vstv %s58
    %v413 = vadd.f32 %v411, %v412
    %vm414 = vcmask 57344
    %415 = vst.msk [vmem:[#allocation9] sm:$0x1] %vm414, %v413
    // Predicated region
    $region34: #{tpu_custom_call.1} parent=1 // pred_check
      _
    $region35: #{tpu_custom_call.1} parent=1 // pred_check_branch
      %417 = sbr.rel (0) target = $region37
    $region36: #{tpu_custom_call.1} parent=1 // pred_region
      %419 = vsyncadd [#allocation4], 0
      %s421 = sshll.u32 [#allocation9], 4
      %s422 = int_to_ptr.vmem [resolvable:$true] %s421
      %s423 = sshll.u32 %s5, 4
      %s424 = int_to_ptr.hbm [resolvable:$true] %s423
      %426 = dma.vmem_to_hbm [thread:$0]  %s422, 16, %s424, [#allocation4]
    $region37: #{tpu_custom_call.1} parent=1 // pred_fallthru
      _
    // Predicated region
    $region38: #{tpu_custom_call.1} parent=1 // pred_check
      _
    $region39: #{tpu_custom_call.1} parent=1 // pred_check_branch
      %428 = sbr.rel (0) target = $region41
    $region40: #{tpu_custom_call.1} parent=1 // pred_region
      %430 = dma.done [#allocation4], 16
    $region41: #{tpu_custom_call.1} parent=1 // pred_fallthru
      _
    %431 = vsyncpa [#allocation4], 1
    %432 = vsyncpa [#allocation5], 1
    %433 = vsyncpa [#allocation7], 1

</llo_original>
